<compile_context>
chip_gen: v6e
topology: v6e:2x2x1
jax: 0.10.0
libtpu: 0.0.40
codegen_flags: <defaults>
</compile_context>

<pallas_src>
import math

import jax
import jax.numpy as jnp
from jax.experimental import pallas as pl
from jax.experimental.pallas import tpu as pltpu

# ---------------- configuration (small synthetic shapes) -------------------
IMG_H = 16
IMG_W = 16
IN_CH = 3
STEM_K = 3
STEM_STRIDE = 4
STEM_PAD = 1
C_FEAT = 32
NUM_ANCHORS = 2
MIN_SIZES = (16, 32)            # -> NUM_ANCHORS anchors per cell
VARIANCES = (0.1, 0.2)          # cfg['variance']
MEAN_BGR = (104.0, 117.0, 123.0)

K_RAW = STEM_K * STEM_K * IN_CH      # 27
K_PAD = 32                           # patches padded (col 27 = constant 1 -> bias)
OUT_W = 128                          # lane-dense packed output width
SCORE_COL0 = 8                       # packed column of first score

# packed output column layout (columns of the [M, 128] kernel output):
#   [ 0: 4] box mins   (min_x a0, min_y a0, min_x a1, min_y a1)
#   [ 4: 8] box maxs   (same ordering)
#   [ 8:10] scores     (a0, a1)
#   [10:12] pad
#   [12:32] landmarks  (a0 x10, a1 x10)
#   [32:128] pad (zeros)


# ------------------------------ Pallas kernel -------------------------------
def _fused_kernel(patches_ref, w_stem_ref, w_lin_ref, w_exp_ref,
                  cconst_ref, add_ref, out_ref):
    """Fused preprocess + conv stem + heads + softmax + prior decode.

    cconst rows: [0]=v0*prior_wh multiplier, [1]=+-0.5*prior_wh exp coefficient,
                 [2]=exp-argument bias, [3:8]=zero padding.
    """
    # conv stem as one matmul; (x - mean) preprocess and stem bias are folded
    # into the weight (patch column 27 is the constant 1).
    feat = jnp.maximum(
        jnp.dot(patches_ref[...], w_stem_ref[...],
                preferred_element_type=jnp.float32), 0.0)

    # two lane-dense [C_FEAT, 128] head matmuls whose columns already match the
    # final packed output layout -> no in-kernel lane slicing / concatenation.
    raw_lin = jnp.dot(feat, w_lin_ref[...], preferred_element_type=jnp.float32)
    raw_exp = (jnp.dot(feat, w_exp_ref[...], preferred_element_type=jnp.float32)
               + cconst_ref[2:3, :])

    # full-width FMA decode: prior centre (+ folded head bias) + raw * v0*wh.
    lin = add_ref[...] + raw_lin * cconst_ref[0:1, :]

    # exp path (EUP): box sizes exp(v1*dwh) and sigmoid argument exp(bg-face).
    e = jnp.exp(raw_exp)

    # 2-class softmax class-1 == 1 / (1 + exp(bg - face)) on the score columns.
    col = jax.lax.broadcasted_iota(jnp.int32, out_ref.shape, 1)
    is_score = jnp.logical_and(col >= SCORE_COL0, col < SCORE_COL0 + NUM_ANCHORS)
    scores = pl.reciprocal(1.0 + e, approx=True)

    out_ref[...] = jnp.where(is_score, scores, lin + cconst_ref[1:2, :] * e)


# ------------------------------ pallas wrapper ------------------------------
def _run_fused(patches, kp, add_tab, cconst, M):
    full = lambda i: (0, 0)
    flops = 2 * M * K_PAD * C_FEAT + 2 * (2 * M * C_FEAT * OUT_W)
    bytes_acc = 4 * (patches.size + kp["w_stem_p"].size + kp["w_lin"].size
                     + kp["w_exp"].size + cconst.size + add_tab.size + M * OUT_W)
    return pl.pallas_call(
        _fused_kernel,
        out_shape=jax.ShapeDtypeStruct((M, OUT_W), jnp.float32),
        grid=(1,),
        in_specs=[
            pl.BlockSpec((M, K_PAD), full),        # patches (all batches, M=B*T rows)
            pl.BlockSpec((K_PAD, C_FEAT), full),   # stem weight (mean+bias folded)
            pl.BlockSpec((C_FEAT, OUT_W), full),   # linear-part head weight
            pl.BlockSpec((C_FEAT, OUT_W), full),   # exp-part head weight
            pl.BlockSpec((8, OUT_W), full),        # column constants (mul|coef|bexp)
            pl.BlockSpec((M, OUT_W), full),        # per-row additive prior table
        ],
        out_specs=pl.BlockSpec((M, OUT_W), full),
        compiler_params=pltpu.CompilerParams(
            dimension_semantics=("arbitrary",)),
        cost_estimate=pl.CostEstimate(
            flops=flops, transcendentals=2 * M * OUT_W, bytes_accessed=bytes_acc),
    )(patches, kp["w_stem_p"], kp["w_lin"], kp["w_exp"], cconst, add_tab)


# ------------------------------ glue (plain JAX) -----------------------------
def _im2col(imgs):
    """Extract 3x3/stride-4 patches.  Padding value = per-channel mean so that
    after the (folded) mean subtraction the border behaves like zero-padding
    of a mean-subtracted image (matches PyTorch conv with zero pad)."""
    B, H, W, C = imgs.shape
    mean = jnp.asarray(MEAN_BGR, jnp.float32)
    Hp, Wp = H + 2 * STEM_PAD, W + 2 * STEM_PAD
    xp = jnp.broadcast_to(mean[None, None, None, :], (B, Hp, Wp, C))
    xp = xp.at[:, STEM_PAD:STEM_PAD + H, STEM_PAD:STEM_PAD + W, :].set(imgs)
    Hf = (H + 2 * STEM_PAD - STEM_K) // STEM_STRIDE + 1
    Wf = (W + 2 * STEM_PAD - STEM_K) // STEM_STRIDE + 1
    pieces = []
    for di in range(STEM_K):
        for dj in range(STEM_K):
            pieces.append(
                xp[:, di:di + STEM_STRIDE * (Hf - 1) + 1:STEM_STRIDE,
                      dj:dj + STEM_STRIDE * (Wf - 1) + 1:STEM_STRIDE, :])
    patches = jnp.stack(pieces, axis=3)               # [B,Hf,Wf,K*K,C]
    return patches.reshape(B * Hf * Wf, K_RAW), Hf, Wf


def _build_patches(imgs):
    """im2col + pad 27 -> 32: column 27 = 1.0 (carries the folded stem bias)."""
    patches, Hf, Wf = _im2col(imgs)                                   # [B*T, 27]
    rows = patches.shape[0]
    ones = jnp.ones((rows, 1), jnp.float32)
    zeros = jnp.zeros((rows, K_PAD - K_RAW - 1), jnp.float32)
    return jnp.concatenate([patches, ones, zeros], axis=1), Hf, Wf    # [B*T, 32]


def make_priors(img_h, img_w):
    """PriorBox: (cx, cy, s_kx, s_ky) per cell/min_size (reference decode)."""
    fh = int(math.ceil(img_h / STEM_STRIDE))
    fw = int(math.ceil(img_w / STEM_STRIDE))
    anchors = []
    for i in range(fh):
        for j in range(fw):
            for ms in MIN_SIZES:
                cx = (j + 0.5) * STEM_STRIDE / img_w
                cy = (i + 0.5) * STEM_STRIDE / img_h
                anchors.append((cx, cy, ms / img_w, ms / img_h))
    return jnp.asarray(anchors, dtype=jnp.float32)     # [N, 4]


def make_prior_tables(p, img_h, img_w):
    """Per-cell additive table [T,128] (prior centres + folded linear-head
    biases) and one [8,128] column-constant block (mul | exp-coef | exp-bias)."""
    assert len(MIN_SIZES) == NUM_ANCHORS == 2
    fh = int(math.ceil(img_h / STEM_STRIDE))
    fw = int(math.ceil(img_w / STEM_STRIDE))
    v0, v1 = VARIANCES
    w0, h0 = MIN_SIZES[0] / img_w, MIN_SIZES[0] / img_h
    w1, h1 = MIN_SIZES[1] / img_w, MIN_SIZES[1] / img_h
    f32 = jnp.float32
    z = lambda n: jnp.zeros((n,), f32)

    # v0 * prior_wh multiplier per packed column.
    mul4 = jnp.asarray([v0 * w0, v0 * h0, v0 * w1, v0 * h1], f32)
    mul_ld = jnp.concatenate([jnp.tile(jnp.asarray([v0 * w0, v0 * h0], f32), 5),
                              jnp.tile(jnp.asarray([v0 * w1, v0 * h1], f32), 5)])
    mul_row = jnp.concatenate([mul4, mul4, z(4), mul_ld, z(96)])          # [128]

    # +-0.5 * prior_wh coefficient on exp() per packed column (box corners only).
    half4 = 0.5 * jnp.asarray([w0, h0, w1, h1], f32)
    coef_row = jnp.concatenate([-half4, half4, z(120)])                   # [128]

    # exp-argument bias per packed column (v1 * dwh bias, bg - face bias).
    bl, bc, bm = p["b_loc"][0], p["b_conf"][0], p["b_ldm"][0]
    bdwh = v1 * jnp.concatenate([bl[2:4], bl[6:8]])
    bsc = jnp.stack([bc[0] - bc[1], bc[2] - bc[3]])
    bexp_row = jnp.concatenate([bdwh, bdwh, bsc, z(118)])                 # [128]

    cconst = jnp.zeros((8, OUT_W), f32)
    cconst = cconst.at[0].set(mul_row).at[1].set(coef_row).at[2].set(bexp_row)

    # per-cell additive table: prior centres, with the linear-head bias folded in.
    i_idx = jnp.repeat(jnp.arange(fh), fw).astype(f32)
    j_idx = jnp.tile(jnp.arange(fw), fh).astype(f32)
    cx = (j_idx + 0.5) * STEM_STRIDE / img_w
    cy = (i_idx + 0.5) * STEM_STRIDE / img_h
    colv = jnp.arange(OUT_W)
    use = ((colv < 8) | ((colv >= 12) & (colv < 32))).astype(f32)
    xsel = (colv % 2 == 0).astype(f32)
    centre = use[None, :] * (xsel[None, :] * cx[:, None]
                             + (1.0 - xsel)[None, :] * cy[:, None])       # [T,128]

    blin_box = jnp.concatenate([bl[0:2], bl[4:6]])
    blin_row = jnp.concatenate([blin_box, blin_box, z(4), bm, z(96)])     # [128]
    add_tab = centre + (blin_row * mul_row)[None, :]                      # [T,128]
    return add_tab, cconst


def init_params(key):
    ks = jax.random.split(key, 8)
    s = 0.05
    return dict(
        w_stem=s * jax.random.normal(ks[0], (K_RAW, C_FEAT), jnp.float32),
        b_stem=s * jax.random.normal(ks[1], (1, C_FEAT), jnp.float32),
        w_loc=s * jax.random.normal(ks[2], (C_FEAT, NUM_ANCHORS * 4), jnp.float32),
        b_loc=s * jax.random.normal(ks[3], (1, NUM_ANCHORS * 4), jnp.float32),
        w_conf=s * jax.random.normal(ks[4], (C_FEAT, NUM_ANCHORS * 2), jnp.float32),
        b_conf=s * jax.random.normal(ks[5], (1, NUM_ANCHORS * 2), jnp.float32),
        w_ldm=s * jax.random.normal(ks[6], (C_FEAT, NUM_ANCHORS * 10), jnp.float32),
        b_ldm=s * jax.random.normal(ks[7], (1, NUM_ANCHORS * 10), jnp.float32),
    )


def prepare_kernel_params(p):
    """Fold mean+bias into the stem weight; build the two lane-dense head
    weight matrices whose columns match the packed output layout."""
    v1 = VARIANCES[1]
    mean_row = jnp.tile(jnp.asarray(MEAN_BGR, jnp.float32), STEM_K * STEM_K)[None, :]
    b_stem_f = p["b_stem"] - mean_row @ p["w_stem"]              # exact fold
    w_stem_p = jnp.concatenate(
        [p["w_stem"], b_stem_f,
         jnp.zeros((K_PAD - K_RAW - 1, C_FEAT), jnp.float32)], axis=0)   # [32,32]

    wl, wc, wm = p["w_loc"], p["w_conf"], p["w_ldm"]
    z = lambda n: jnp.zeros((C_FEAT, n), jnp.float32)
    # linear-part columns: dxy(a0,a1) | dxy(a0,a1) | 0x4 | landm(a0 x10, a1 x10) | 0x96
    dxy = jnp.concatenate([wl[:, 0:2], wl[:, 4:6]], axis=1)
    w_lin = jnp.concatenate([dxy, dxy, z(4), wm, z(96)], axis=1)         # [32,128]
    # exp-part columns: v1*dwh(a0,a1) | v1*dwh(a0,a1) | (bg-face)(a0,a1) | 0x118
    dwh = v1 * jnp.concatenate([wl[:, 2:4], wl[:, 6:8]], axis=1)
    wsc = jnp.concatenate([wc[:, 0:1] - wc[:, 1:2], wc[:, 2:3] - wc[:, 3:4]], axis=1)
    w_exp = jnp.concatenate([dwh, dwh, wsc, z(118)], axis=1)             # [32,128]
    return dict(w_stem_p=w_stem_p, w_lin=w_lin, w_exp=w_exp)


def my_model_forward(imgs, kparams, add_tab_cell, cconst):
    """imgs: [B,H,W,3] -> (boxes [B,N,1,4], scores [B,N,1], landms [B,N,1,10])."""
    B = imgs.shape[0]
    patches, Hf, Wf = _build_patches(imgs)                       # [B*T, 32]
    T = Hf * Wf
    M = B * T
    # prior table shared across batch; host-tiled (tiny at this size).
    # TODO(synk): at real resolutions broadcast via a stride-0 / per-tile index_map.
    add_tab = jnp.tile(add_tab_cell, (B, 1))                     # [B*T, 128]

    out = _run_fused(patches, kparams, add_tab, cconst, M)       # [B*T, 128]

    N = T * NUM_ANCHORS
    mins = out[:, 0:4].reshape(B, T, NUM_ANCHORS, 2)
    maxs = out[:, 4:8].reshape(B, T, NUM_ANCHORS, 2)
    boxes = jnp.concatenate([mins, maxs], axis=-1).reshape(B, N, 1, 4)
    scores = out[:, 8:10].reshape(B, N, 1)
    landms = out[:, 12:32].reshape(B, N, 1, 10)
    return boxes, scores, landms


# ------------------------------ pure-JAX reference ---------------------------
def _reference_forward(imgs, params, priors):
    B = imgs.shape[0]
    patches, Hf, Wf = _im2col(imgs)
    mean_row = jnp.tile(jnp.asarray(MEAN_BGR, jnp.float32), STEM_K * STEM_K)[None, :]
    x = patches - mean_row
    feat = jnp.maximum(x @ params["w_stem"] + params["b_stem"], 0.0)
    loc = (feat @ params["w_loc"] + params["b_loc"]).reshape(B, -1, 4)
    conf = jax.nn.softmax(
        (feat @ params["w_conf"] + params["b_conf"]).reshape(B, -1, 2), axis=-1)
    ldm = (feat @ params["w_ldm"] + params["b_ldm"]).reshape(B, -1, 10)
    v0, v1 = VARIANCES
    pr = priors[None]
    cxy = pr[:, :, :2] + loc[:, :, :2] * v0 * pr[:, :, 2:]
    wh = pr[:, :, 2:] * jnp.exp(loc[:, :, 2:] * v1)
    boxes = jnp.concatenate([cxy - wh / 2, cxy + wh / 2], axis=2)[:, :, None, :]
    scores = conf[:, :, 1][:, :, None]
    landms = jnp.concatenate(
        [pr[:, :, :2] + ldm[:, :, 2 * k:2 * k + 2] * v0 * pr[:, :, 2:]
         for k in range(5)], axis=2)[:, :, None, :]
    return boxes, scores, landms


# ---------------------------------- main ----------------------------------
if __name__ == "__main__":
    key = jax.random.PRNGKey(0)
    k_img, k_par = jax.random.split(key)
    imgs = jax.random.uniform(k_img, (2, IMG_H, IMG_W, IN_CH),
                              dtype=jnp.float32, minval=0.0, maxval=255.0)
    params = init_params(k_par)
    kparams = prepare_kernel_params(params)
    add_tab_cell, cconst = make_prior_tables(params, IMG_H, IMG_W)
    priors = make_priors(IMG_H, IMG_W)

    fwd = jax.jit(lambda x: my_model_forward(x, kparams, add_tab_cell, cconst))
    boxes, scores, landms = fwd(imgs)
    jax.block_until_ready((boxes, scores, landms))

    rb, rs, rl = _reference_forward(imgs, params, priors)
    assert boxes.shape == (2, 32, 1, 4) and scores.shape == (2, 32, 1) \
        and landms.shape == (2, 32, 1, 10)
    assert jnp.allclose(boxes, rb, atol=5e-4, rtol=1e-4), "boxes mismatch"
    # scores use pl.reciprocal(approx=True) -> slightly relaxed tolerance
    assert jnp.allclose(scores, rs, atol=2e-3, rtol=1e-3), "scores mismatch"
    assert jnp.allclose(landms, rl, atol=5e-4, rtol=1e-4), "landmarks mismatch"

    print("KERNEL_OK")
</pallas_src>

<mosaic_0001>
module attributes {stable_mosaic.version = 11 : i64} {
  func.func @_fused_kernel(%arg0: i32, %arg1: memref<32x32xf32, #tpu.memory_space<vmem>>, %arg2: memref<32x32xf32, #tpu.memory_space<vmem>>, %arg3: memref<32x128xf32, #tpu.memory_space<vmem>>, %arg4: memref<32x128xf32, #tpu.memory_space<vmem>>, %arg5: memref<8x128xf32, #tpu.memory_space<vmem>>, %arg6: memref<32x128xf32, #tpu.memory_space<vmem>>, %arg7: memref<32x128xf32, #tpu.memory_space<vmem>>) attributes {dimension_semantics = [#tpu.dimension_semantics<arbitrary>], iteration_bounds = array<i64: 1>, scalar_prefetch = 0 : i64, scratch_operands = 0 : i64, tpu.core_type = #tpu.core_type<tc>, window_params = [{pipeline_mode = #tpu.pipeline_mode<synchronous>, transform_indices = @transform_0, window_bounds = array<i64: 32, 32>}, {pipeline_mode = #tpu.pipeline_mode<synchronous>, transform_indices = @transform_1, window_bounds = array<i64: 32, 32>}, {pipeline_mode = #tpu.pipeline_mode<synchronous>, transform_indices = @transform_2, window_bounds = array<i64: 32, 128>}, {pipeline_mode = #tpu.pipeline_mode<synchronous>, transform_indices = @transform_3, window_bounds = array<i64: 32, 128>}, {pipeline_mode = #tpu.pipeline_mode<synchronous>, transform_indices = @transform_4, window_bounds = array<i64: 8, 128>}, {pipeline_mode = #tpu.pipeline_mode<synchronous>, transform_indices = @transform_5, window_bounds = array<i64: 32, 128>}, {pipeline_mode = #tpu.pipeline_mode<synchronous>, transform_indices = @transform_6, window_bounds = array<i64: 32, 128>}]} {
    %c0 = arith.constant 0 : index
    %c0_0 = arith.constant 0 : index
    %0 = vector.load %arg1[%c0, %c0_0] : memref<32x32xf32, #tpu.memory_space<vmem>>, vector<32x32xf32>
    %c0_1 = arith.constant 0 : index
    %c0_2 = arith.constant 0 : index
    %1 = vector.load %arg2[%c0_1, %c0_2] : memref<32x32xf32, #tpu.memory_space<vmem>>, vector<32x32xf32>
    %cst = arith.constant dense<0.000000e+00> : vector<32x32xf32>
    %2 = tpu.matmul %0, %1, %cst {dimension_numbers = #tpu.dot_dimension_numbers<[1], [0], [0], [1], [0, 0, 1, 1], [], []>} : vector<32x32xf32>, vector<32x32xf32>, vector<32x32xf32> -> vector<32x32xf32>
    %cst_3 = arith.constant 0.000000e+00 : f32
    %3 = vector.broadcast %cst_3 : f32 to vector<32x32xf32>
    %4 = arith.maximumf %2, %3 : vector<32x32xf32>
    %c0_4 = arith.constant 0 : index
    %c0_5 = arith.constant 0 : index
    %5 = vector.load %arg3[%c0_4, %c0_5] : memref<32x128xf32, #tpu.memory_space<vmem>>, vector<32x128xf32>
    %cst_6 = arith.constant dense<0.000000e+00> : vector<32x128xf32>
    %6 = tpu.matmul %4, %5, %cst_6 {dimension_numbers = #tpu.dot_dimension_numbers<[1], [0], [0], [1], [0, 0, 1, 1], [], []>} : vector<32x32xf32>, vector<32x128xf32>, vector<32x128xf32> -> vector<32x128xf32>
    %c0_7 = arith.constant 0 : index
    %c0_8 = arith.constant 0 : index
    %7 = vector.load %arg4[%c0_7, %c0_8] : memref<32x128xf32, #tpu.memory_space<vmem>>, vector<32x128xf32>
    %cst_9 = arith.constant dense<0.000000e+00> : vector<32x128xf32>
    %8 = tpu.matmul %4, %7, %cst_9 {dimension_numbers = #tpu.dot_dimension_numbers<[1], [0], [0], [1], [0, 0, 1, 1], [], []>} : vector<32x32xf32>, vector<32x128xf32>, vector<32x128xf32> -> vector<32x128xf32>
    %c2 = arith.constant 2 : index
    %c0_10 = arith.constant 0 : index
    %9 = vector.load %arg5[%c2, %c0_10] : memref<8x128xf32, #tpu.memory_space<vmem>>, vector<1x128xf32>
    %10 = vector.broadcast %9 : vector<1x128xf32> to vector<32x128xf32>
    %11 = arith.addf %8, %10 : vector<32x128xf32>
    %c0_11 = arith.constant 0 : index
    %c0_12 = arith.constant 0 : index
    %12 = vector.load %arg6[%c0_11, %c0_12] : memref<32x128xf32, #tpu.memory_space<vmem>>, vector<32x128xf32>
    %c0_13 = arith.constant 0 : index
    %c0_14 = arith.constant 0 : index
    %13 = vector.load %arg5[%c0_13, %c0_14] : memref<8x128xf32, #tpu.memory_space<vmem>>, vector<1x128xf32>
    %14 = vector.broadcast %13 : vector<1x128xf32> to vector<32x128xf32>
    %15 = arith.mulf %6, %14 : vector<32x128xf32>
    %16 = arith.addf %12, %15 : vector<32x128xf32>
    %17 = math.exp %11 : vector<32x128xf32>
    %18 = tpu.iota {dimensions = array<i32: 1>} : vector<32x128xi32>
    %c8_i32 = arith.constant 8 : i32
    %19 = vector.broadcast %c8_i32 : i32 to vector<32x128xi32>
    %20 = arith.cmpi sge, %18, %19 : vector<32x128xi32>
    %c10_i32 = arith.constant 10 : i32
    %21 = vector.broadcast %c10_i32 : i32 to vector<32x128xi32>
    %22 = arith.cmpi slt, %18, %21 : vector<32x128xi32>
    %23 = arith.andi %20, %22 : vector<32x128xi1>
    %cst_15 = arith.constant 1.000000e+00 : f32
    %24 = vector.broadcast %cst_15 : f32 to vector<32x128xf32>
    %25 = arith.addf %24, %17 : vector<32x128xf32>
    %26 = tpu.reciprocal %25 {approx = true} : vector<32x128xf32> -> vector<32x128xf32>
    %c1 = arith.constant 1 : index
    %c0_16 = arith.constant 0 : index
    %27 = vector.load %arg5[%c1, %c0_16] : memref<8x128xf32, #tpu.memory_space<vmem>>, vector<1x128xf32>
    %28 = vector.broadcast %27 : vector<1x128xf32> to vector<32x128xf32>
    %29 = arith.mulf %28, %17 : vector<32x128xf32>
    %30 = arith.addf %16, %29 : vector<32x128xf32>
    %31 = arith.select %23, %26, %30 : vector<32x128xi1>, vector<32x128xf32>
    %c0_17 = arith.constant 0 : index
    %c0_18 = arith.constant 0 : index
    %32 = vector.load %arg7[%c0_17, %c0_18] : memref<32x128xf32, #tpu.memory_space<vmem>>, vector<32x128xf32>
    tpu.vector_store %arg7[%c0_17, %c0_18], %31 {strides = array<i32>} : memref<32x128xf32, #tpu.memory_space<vmem>>, vector<32x128xf32>,
    return
  }
  func.func @transform_0(%arg0: i32) -> (i32, i32) {
    %c0_i32 = arith.constant 0 : i32
    %c0_i32_0 = arith.constant 0 : i32
    %c0_i32_1 = arith.constant 0 : i32
    return %c0_i32, %c0_i32_0 : i32, i32
  }
  func.func @transform_1(%arg0: i32) -> (i32, i32) {
    %c0_i32 = arith.constant 0 : i32
    %c0_i32_0 = arith.constant 0 : i32
    %c0_i32_1 = arith.constant 0 : i32
    return %c0_i32, %c0_i32_0 : i32, i32
  }
  func.func @transform_2(%arg0: i32) -> (i32, i32) {
    %c0_i32 = arith.constant 0 : i32
    %c0_i32_0 = arith.constant 0 : i32
    %c0_i32_1 = arith.constant 0 : i32
    return %c0_i32, %c0_i32_0 : i32, i32
  }
  func.func @transform_3(%arg0: i32) -> (i32, i32) {
    %c0_i32 = arith.constant 0 : i32
    %c0_i32_0 = arith.constant 0 : i32
    %c0_i32_1 = arith.constant 0 : i32
    return %c0_i32, %c0_i32_0 : i32, i32
  }
  func.func @transform_4(%arg0: i32) -> (i32, i32) {
    %c0_i32 = arith.constant 0 : i32
    %c0_i32_0 = arith.constant 0 : i32
    %c0_i32_1 = arith.constant 0 : i32
    return %c0_i32, %c0_i32_0 : i32, i32
  }
  func.func @transform_5(%arg0: i32) -> (i32, i32) {
    %c0_i32 = arith.constant 0 : i32
    %c0_i32_0 = arith.constant 0 : i32
    %c0_i32_1 = arith.constant 0 : i32
    return %c0_i32, %c0_i32_0 : i32, i32
  }
  func.func @transform_6(%arg0: i32) -> (i32, i32) {
    %c0_i32 = arith.constant 0 : i32
    %c0_i32_0 = arith.constant 0 : i32
    %c0_i32_1 = arith.constant 0 : i32
    return %c0_i32, %c0_i32_0 : i32, i32
  }
}

</mosaic_0001>

<llo_original>
// kernel: _lambda_.1
$region0: #{_lambda_.1}
  #allocation0 [shape = 'u32[]', space=smem, size = 0x4, offset = 0x4, fixed_abs, tag = 'smem constant byte address 0x4 - core index']
  #allocation1 [shape = 'u32[144,128]{1,0:T(1,128)}', space=vmem, size = 0x12000, scoped, tag = 'internal scratch']
  %s0 = inlined_call_operand.vmem [shape: f32[32,32], index: 0, kind: input, shape index: {}]
  %s1 = inlined_call_operand.vmem [shape: f32[32,32], index: 1, kind: input, shape index: {}]
  %s2 = inlined_call_operand.vmem [shape: f32[32,128], index: 2, kind: input, shape index: {}]
  %s3 = inlined_call_operand.vmem [shape: f32[32,128], index: 3, kind: input, shape index: {}]
  %s4 = inlined_call_operand.vmem [shape: f32[8,128], index: 4, kind: input, shape index: {}]
  %s5 = inlined_call_operand.vmem [shape: f32[32,128], index: 5, kind: input, shape index: {}]
  %s6 = inlined_call_operand.vmem [shape: f32[32,128], index: 6, kind: output, shape index: {}]
  %s7 = sld [smem:[#allocation0]]
  $region34: #{_lambda_.1} parent=0
    _
  %s9 = ssub.s32 1, %s7
  %s10 = scalar_select 0, %s9, %s7
  // Predicated region
  $region2: #{_lambda_.1} parent=0 // pred_check
    _
  $region3: #{_lambda_.1} parent=0 // pred_check_branch
    %12 = sbr.rel (0) target = $region5
  $region4: #{_lambda_.1} parent=0 // pred_region
    _
  $region5: #{_lambda_.1} parent=0 // pred_fallthru
    _
  // Predicated region
  $region6: #{_lambda_.1} parent=0 // pred_check
    _
  $region7: #{_lambda_.1} parent=0 // pred_check_branch
    %14 = sbr.rel (0) target = $region9
  $region8: #{_lambda_.1} parent=0 // pred_region
    _
  $region9: #{_lambda_.1} parent=0 // pred_fallthru
    _
  // Predicated region
  $region10: #{_lambda_.1} parent=0 // pred_check
    _
  $region11: #{_lambda_.1} parent=0 // pred_check_branch
    %16 = sbr.rel (0) target = $region13
  $region12: #{_lambda_.1} parent=0 // pred_region
    _
  $region13: #{_lambda_.1} parent=0 // pred_fallthru
    _
  // Predicated region
  $region14: #{_lambda_.1} parent=0 // pred_check
    _
  $region15: #{_lambda_.1} parent=0 // pred_check_branch
    %18 = sbr.rel (0) target = $region17
  $region16: #{_lambda_.1} parent=0 // pred_region
    _
  $region17: #{_lambda_.1} parent=0 // pred_fallthru
    _
  // Predicated region
  $region18: #{_lambda_.1} parent=0 // pred_check
    _
  $region19: #{_lambda_.1} parent=0 // pred_check_branch
    %20 = sbr.rel (0) target = $region21
  $region20: #{_lambda_.1} parent=0 // pred_region
    _
  $region21: #{_lambda_.1} parent=0 // pred_fallthru
    _
  // Predicated region
  $region22: #{_lambda_.1} parent=0 // pred_check
    _
  $region23: #{_lambda_.1} parent=0 // pred_check_branch
    %22 = sbr.rel (0) target = $region25
  $region24: #{_lambda_.1} parent=0 // pred_region
    _
  $region25: #{_lambda_.1} parent=0 // pred_fallthru
    _
  %v23 = vld [vmem:[%s0] sm:$0xff]
  %v24 = vld [vmem:[%s0 + $0x8] sm:$0xff]
  %v25 = vld [vmem:[%s0 + $0x10] sm:$0xff]
  %v26 = vld [vmem:[%s0 + $0x18] sm:$0xff]
  %v27 = vld [vmem:[%s1] sm:$0xff]
  %v28 = vld [vmem:[%s1 + $0x8] sm:$0xff]
  %v29 = vld [vmem:[%s1 + $0x10] sm:$0xff]
  %v30 = vld [vmem:[%s1 + $0x18] sm:$0xff]
  %vm31 = vcmask 261120
  %v33 = vsel %vm31, %v23, 0
  %v36 = vsel %vm31, %v24, 0
  %v39 = vsel %vm31, %v25, 0
  %v42 = vsel %vm31, %v26, 0
  %44 = vmatprep.subr.mxu0 0.0
  %45 = vmatpush1.msra.mxu0 0.0
  %46 = vmatprep.subr.mxu0 0.0
  %47 = vmatpush1.msra.mxu0 0.0
  %48 = vmatprep.subr.mxu0 0.0
  %49 = vmatpush1.msra.mxu0 0.0
  %50 = vmatprep.subr.mxu0 0.0
  %51 = vmatpush1.msra.mxu0 0.0
  %52 = vmatprep.subr.mxu0 0.0
  %53 = vmatpush1.msra.mxu0 0.0
  %54 = vmatprep.subr.mxu0 0.0
  %55 = vmatpush1.msra.mxu0 0.0
  %56 = vmatprep.subr.mxu0 0.0
  %57 = vmatpush1.msra.mxu0 0.0
  %58 = vmatprep.subr.mxu0 0.0
  %59 = vmatpush1.msra.mxu0 0.0
  %60 = vmatprep.subr.mxu0 0.0
  %61 = vmatpush1.msra.mxu0 0.0
  %62 = vmatprep.subr.mxu0 0.0
  %63 = vmatpush1.msra.mxu0 0.0
  %64 = vmatprep.subr.mxu0 0.0
  %65 = vmatpush1.msra.mxu0 0.0
  %66 = vmatprep.subr.mxu0 0.0
  %67 = vmatpush1.msra.mxu0 0.0
  %68 = vmatprep.subr.mxu0 0.0
  %69 = vmatpush1.msra.mxu0 %v30
  %70 = vmatprep.subr.mxu0 0.0
  %71 = vmatpush1.msra.mxu0 %v29
  %72 = vmatprep.subr.mxu0 0.0
  %73 = vmatpush1.msra.mxu0 %v28
  %74 = vmatprep.subr.mxu0 0.0
  %75 = vmatpush1.msra.mxu0 %v27
  %76 = vmatprep.subr.mxu0 0.0
  %77 = vmatpush2.msra.mxu0 0.0
  %78 = vmatprep.subr.mxu0 0.0
  %79 = vmatpush2.msra.mxu0 0.0
  %80 = vmatprep.subr.mxu0 0.0
  %81 = vmatpush2.msra.mxu0 0.0
  %82 = vmatprep.subr.mxu0 0.0
  %83 = vmatpush2.msra.mxu0 0.0
  %84 = vmatprep.subr.mxu0 0.0
  %85 = vmatpush2.msra.mxu0 0.0
  %86 = vmatprep.subr.mxu0 0.0
  %87 = vmatpush2.msra.mxu0 0.0
  %88 = vmatprep.subr.mxu0 0.0
  %89 = vmatpush2.msra.mxu0 0.0
  %90 = vmatprep.subr.mxu0 0.0
  %91 = vmatpush2.msra.mxu0 0.0
  %92 = vmatprep.subr.mxu0 0.0
  %93 = vmatpush2.msra.mxu0 0.0
  %94 = vmatprep.subr.mxu0 0.0
  %95 = vmatpush2.msra.mxu0 0.0
  %96 = vmatprep.subr.mxu0 0.0
  %97 = vmatpush2.msra.mxu0 0.0
  %98 = vmatprep.subr.mxu0 0.0
  %99 = vmatpush2.msra.mxu0 0.0
  %100 = vmatprep.subr.mxu0 0.0
  %101 = vmatpush2.msra.mxu0 0.0
  %102 = vmatprep.subr.mxu0 0.0
  %103 = vmatpush2.msra.mxu0 0.0
  %104 = vmatprep.subr.mxu0 0.0
  %105 = vmatpush2.msra.mxu0 0.0
  %106 = vmatprep.subr.mxu0 0.0
  %107 = vmatpush2.msra.mxu0 0.0
  %108 = vmatprep.mubr.f32.mxu0 0.0
  %109 = vmatmul.mubr.f32.gmra.mxu0 %v33
  %v110 = vpop.f32.mrf.mxu0
  %v111 = vadd.f32 0.0, %v110
  %v112 = vpop.f32.mrf.mxu0
  %113 = vmatprep.mubr.f32.mxu0 0.0
  %114 = vmatmul.mubr.f32.gmra.mxu0 %v36
  %v115 = vpop.f32.mrf.mxu0
  %v116 = vadd.f32 0.0, %v115
  %v117 = vpop.f32.mrf.mxu0
  %118 = vmatprep.mubr.f32.mxu0 0.0
  %119 = vmatmul.mubr.f32.gmra.mxu0 %v39
  %v120 = vpop.f32.mrf.mxu0
  %v121 = vadd.f32 0.0, %v120
  %v122 = vpop.f32.mrf.mxu0
  %123 = vmatprep.mubr.f32.mxu0 0.0
  %124 = vmatmul.mubr.f32.gmra.mxu0 %v42
  %v125 = vpop.f32.mrf.mxu0
  %v126 = vadd.f32 0.0, %v125
  %v127 = vpop.f32.mrf.mxu0
  %128 = vdwg.mxu0
  %v129 = vmax.f32 %v111, 0.0
  %v130 = vmax.f32 %v116, 0.0
  %v131 = vmax.f32 %v121, 0.0
  %v132 = vmax.f32 %v126, 0.0
  %v133 = vld [vmem:[%s2] sm:$0xff]
  %v134 = vld [vmem:[%s2 + $0x8] sm:$0xff]
  %v135 = vld [vmem:[%s2 + $0x10] sm:$0xff]
  %v136 = vld [vmem:[%s2 + $0x18] sm:$0xff]
  %v138 = vsel %vm31, %v129, 0
  %v141 = vsel %vm31, %v130, 0
  %v144 = vsel %vm31, %v131, 0
  %v147 = vsel %vm31, %v132, 0
  %149 = vmatprep.subr.mxu0 0.0
  %150 = vmatpush1.msra.mxu0 0.0
  %151 = vmatprep.subr.mxu0 0.0
  %152 = vmatpush1.msra.mxu0 0.0
  %153 = vmatprep.subr.mxu0 0.0
  %154 = vmatpush1.msra.mxu0 0.0
  %155 = vmatprep.subr.mxu0 0.0
  %156 = vmatpush1.msra.mxu0 0.0
  %157 = vmatprep.subr.mxu0 0.0
  %158 = vmatpush1.msra.mxu0 0.0
  %159 = vmatprep.subr.mxu0 0.0
  %160 = vmatpush1.msra.mxu0 0.0
  %161 = vmatprep.subr.mxu0 0.0
  %162 = vmatpush1.msra.mxu0 0.0
  %163 = vmatprep.subr.mxu0 0.0
  %164 = vmatpush1.msra.mxu0 0.0
  %165 = vmatprep.subr.mxu0 0.0
  %166 = vmatpush1.msra.mxu0 0.0
  %167 = vmatprep.subr.mxu0 0.0
  %168 = vmatpush1.msra.mxu0 0.0
  %169 = vmatprep.subr.mxu0 0.0
  %170 = vmatpush1.msra.mxu0 0.0
  %171 = vmatprep.subr.mxu0 0.0
  %172 = vmatpush1.msra.mxu0 0.0
  %173 = vmatprep.subr.mxu0 0.0
  %174 = vmatpush1.msra.mxu0 %v136
  %175 = vmatprep.subr.mxu0 0.0
  %176 = vmatpush1.msra.mxu0 %v135
  %177 = vmatprep.subr.mxu0 0.0
  %178 = vmatpush1.msra.mxu0 %v134
  %179 = vmatprep.subr.mxu0 0.0
  %180 = vmatpush1.msra.mxu0 %v133
  %181 = vmatprep.subr.mxu0 0.0
  %182 = vmatpush2.msra.mxu0 0.0
  %183 = vmatprep.subr.mxu0 0.0
  %184 = vmatpush2.msra.mxu0 0.0
  %185 = vmatprep.subr.mxu0 0.0
  %186 = vmatpush2.msra.mxu0 0.0
  %187 = vmatprep.subr.mxu0 0.0
  %188 = vmatpush2.msra.mxu0 0.0
  %189 = vmatprep.subr.mxu0 0.0
  %190 = vmatpush2.msra.mxu0 0.0
  %191 = vmatprep.subr.mxu0 0.0
  %192 = vmatpush2.msra.mxu0 0.0
  %193 = vmatprep.subr.mxu0 0.0
  %194 = vmatpush2.msra.mxu0 0.0
  %195 = vmatprep.subr.mxu0 0.0
  %196 = vmatpush2.msra.mxu0 0.0
  %197 = vmatprep.subr.mxu0 0.0
  %198 = vmatpush2.msra.mxu0 0.0
  %199 = vmatprep.subr.mxu0 0.0
  %200 = vmatpush2.msra.mxu0 0.0
  %201 = vmatprep.subr.mxu0 0.0
  %202 = vmatpush2.msra.mxu0 0.0
  %203 = vmatprep.subr.mxu0 0.0
  %204 = vmatpush2.msra.mxu0 0.0
  %205 = vmatprep.subr.mxu0 0.0
  %206 = vmatpush2.msra.mxu0 0.0
  %207 = vmatprep.subr.mxu0 0.0
  %208 = vmatpush2.msra.mxu0 0.0
  %209 = vmatprep.subr.mxu0 0.0
  %210 = vmatpush2.msra.mxu0 0.0
  %211 = vmatprep.subr.mxu0 0.0
  %212 = vmatpush2.msra.mxu0 0.0
  %213 = vmatprep.mubr.f32.mxu0 0.0
  %214 = vmatmul.mubr.f32.gmra.mxu0 %v138
  %v215 = vpop.f32.mrf.mxu0
  %v216 = vadd.f32 0.0, %v215
  %v217 = vpop.f32.mrf.mxu0
  %218 = vmatprep.mubr.f32.mxu0 0.0
  %219 = vmatmul.mubr.f32.gmra.mxu0 %v141
  %v220 = vpop.f32.mrf.mxu0
  %v221 = vadd.f32 0.0, %v220
  %v222 = vpop.f32.mrf.mxu0
  %223 = vmatprep.mubr.f32.mxu0 0.0
  %224 = vmatmul.mubr.f32.gmra.mxu0 %v144
  %v225 = vpop.f32.mrf.mxu0
  %v226 = vadd.f32 0.0, %v225
  %v227 = vpop.f32.mrf.mxu0
  %228 = vmatprep.mubr.f32.mxu0 0.0
  %229 = vmatmul.mubr.f32.gmra.mxu0 %v147
  %v230 = vpop.f32.mrf.mxu0
  %v231 = vadd.f32 0.0, %v230
  %v232 = vpop.f32.mrf.mxu0
  %233 = vdwg.mxu0
  %v234 = vld [vmem:[%s3] sm:$0xff]
  %v235 = vld [vmem:[%s3 + $0x8] sm:$0xff]
  %v236 = vld [vmem:[%s3 + $0x10] sm:$0xff]
  %v237 = vld [vmem:[%s3 + $0x18] sm:$0xff]
  %v238 = vld [vmem:[%s4 + $0x2] sm:$0x1]
  %v239 = vlaneseq
  %v240 = vshrl.u32 %v239, 7
  %v241 = vsub.s32 0, %v240
  %v242 = vrot.slane %v238, %v241
  %243 = vmatprep.subr.mxu0 0.0
  %244 = vmatpush1.msra.mxu0 0.0
  %245 = vmatprep.subr.mxu0 0.0
  %246 = vmatpush1.msra.mxu0 0.0
  %247 = vmatprep.subr.mxu0 0.0
  %248 = vmatpush1.msra.mxu0 0.0
  %249 = vmatprep.subr.mxu0 0.0
  %250 = vmatpush1.msra.mxu0 0.0
  %251 = vmatprep.subr.mxu0 0.0
  %252 = vmatpush1.msra.mxu0 0.0
  %253 = vmatprep.subr.mxu0 0.0
  %254 = vmatpush1.msra.mxu0 0.0
  %255 = vmatprep.subr.mxu0 0.0
  %256 = vmatpush1.msra.mxu0 0.0
  %257 = vmatprep.subr.mxu0 0.0
  %258 = vmatpush1.msra.mxu0 0.0
  %259 = vmatprep.subr.mxu0 0.0
  %260 = vmatpush1.msra.mxu0 0.0
  %261 = vmatprep.subr.mxu0 0.0
  %262 = vmatpush1.msra.mxu0 0.0
  %263 = vmatprep.subr.mxu0 0.0
  %264 = vmatpush1.msra.mxu0 0.0
  %265 = vmatprep.subr.mxu0 0.0
  %266 = vmatpush1.msra.mxu0 0.0
  %267 = vmatprep.subr.mxu0 0.0
  %268 = vmatpush1.msra.mxu0 %v237
  %269 = vmatprep.subr.mxu0 0.0
  %270 = vmatpush1.msra.mxu0 %v236
  %271 = vmatprep.subr.mxu0 0.0
  %272 = vmatpush1.msra.mxu0 %v235
  %273 = vmatprep.subr.mxu0 0.0
  %274 = vmatpush1.msra.mxu0 %v234
  %275 = vmatprep.subr.mxu0 0.0
  %276 = vmatpush2.msra.mxu0 0.0
  %277 = vmatprep.subr.mxu0 0.0
  %278 = vmatpush2.msra.mxu0 0.0
  %279 = vmatprep.subr.mxu0 0.0
  %280 = vmatpush2.msra.mxu0 0.0
  %281 = vmatprep.subr.mxu0 0.0
  %282 = vmatpush2.msra.mxu0 0.0
  %283 = vmatprep.subr.mxu0 0.0
  %284 = vmatpush2.msra.mxu0 0.0
  %285 = vmatprep.subr.mxu0 0.0
  %286 = vmatpush2.msra.mxu0 0.0
  %287 = vmatprep.subr.mxu0 0.0
  %288 = vmatpush2.msra.mxu0 0.0
  %289 = vmatprep.subr.mxu0 0.0
  %290 = vmatpush2.msra.mxu0 0.0
  %291 = vmatprep.subr.mxu0 0.0
  %292 = vmatpush2.msra.mxu0 0.0
  %293 = vmatprep.subr.mxu0 0.0
  %294 = vmatpush2.msra.mxu0 0.0
  %295 = vmatprep.subr.mxu0 0.0
  %296 = vmatpush2.msra.mxu0 0.0
  %297 = vmatprep.subr.mxu0 0.0
  %298 = vmatpush2.msra.mxu0 0.0
  %299 = vmatprep.subr.mxu0 0.0
  %300 = vmatpush2.msra.mxu0 0.0
  %301 = vmatprep.subr.mxu0 0.0
  %302 = vmatpush2.msra.mxu0 0.0
  %303 = vmatprep.subr.mxu0 0.0
  %304 = vmatpush2.msra.mxu0 0.0
  %305 = vmatprep.subr.mxu0 0.0
  %306 = vmatpush2.msra.mxu0 0.0
  %307 = vmatprep.mubr.f32.mxu0 0.0
  %308 = vmatmul.mubr.f32.gmra.mxu0 %v138
  %v309 = vpop.f32.mrf.mxu0
  %v310 = vadd.f32 %v242, %v309
  %v311 = vpop.f32.mrf.mxu0
  %312 = vmatprep.mubr.f32.mxu0 0.0
  %313 = vmatmul.mubr.f32.gmra.mxu0 %v141
  %v314 = vpop.f32.mrf.mxu0
  %v315 = vadd.f32 %v242, %v314
  %v316 = vpop.f32.mrf.mxu0
  %317 = vmatprep.mubr.f32.mxu0 0.0
  %318 = vmatmul.mubr.f32.gmra.mxu0 %v144
  %v319 = vpop.f32.mrf.mxu0
  %v320 = vadd.f32 %v242, %v319
  %v321 = vpop.f32.mrf.mxu0
  %322 = vmatprep.mubr.f32.mxu0 0.0
  %323 = vmatmul.mubr.f32.gmra.mxu0 %v147
  %v324 = vpop.f32.mrf.mxu0
  %v325 = vadd.f32 %v242, %v324
  %v326 = vpop.f32.mrf.mxu0
  %327 = vdwg.mxu0
  %v328 = vld [vmem:[%s5] sm:$0xff]
  %v329 = vld [vmem:[%s5 + $0x8] sm:$0xff]
  %v330 = vld [vmem:[%s5 + $0x10] sm:$0xff]
  %v331 = vld [vmem:[%s5 + $0x18] sm:$0xff]
  %v332 = vld [vmem:[%s4] sm:$0x1]
  %v333 = vlaneseq
  %v334 = vshrl.u32 %v333, 7
  %v335 = vsub.s32 0, %v334
  %v336 = vrot.slane %v332, %v335
  %v337 = vmul.f32 %v216, %v336
  %v338 = vmul.f32 %v221, %v336
  %v339 = vmul.f32 %v226, %v336
  %v340 = vmul.f32 %v231, %v336
  %v341 = vadd.f32 %v328, %v337
  %v342 = vadd.f32 %v329, %v338
  %v343 = vadd.f32 %v330, %v339
  %v344 = vadd.f32 %v331, %v340
  %v345 = vmul.f32 %v310, 1.442695
  %v346 = vpow.pop %v345
  %v347 = vmul.f32 %v315, 1.442695
  %v348 = vpow.pop %v347
  %v349 = vmul.f32 %v320, 1.442695
  %v350 = vpow.pop %v349
  %v351 = vmul.f32 %v325, 1.442695
  %v352 = vpow.pop %v351
  %v353 = vlaneseq
  %v354 = vand.u32 %v353, 127
  %vm355 = vcmp.ge.s32.totalorder %v354, 8
  %vm356 = vcmp.lt.s32.totalorder %v354, 10
  %vm357 = vmand %vm355, %vm356
  %v358 = vadd.f32 %v346, 1.0
  %v359 = vadd.f32 %v348, 1.0
  %v360 = vadd.f32 %v350, 1.0
  %v361 = vadd.f32 %v352, 1.0
  %v362 = vrcp.pop %v358
  %v363 = vrcp.pop %v359
  %v364 = vrcp.pop %v360
  %v365 = vrcp.pop %v361
  %v366 = vld [vmem:[%s4 + $0x1] sm:$0x1]
  %v367 = vlaneseq
  %v368 = vshrl.u32 %v367, 7
  %v369 = vsub.s32 0, %v368
  %v370 = vrot.slane %v366, %v369
  %v371 = vmul.f32 %v370, %v346
  %v372 = vmul.f32 %v370, %v348
  %v373 = vmul.f32 %v370, %v350
  %v374 = vmul.f32 %v370, %v352
  %v375 = vadd.f32 %v341, %v371
  %v376 = vadd.f32 %v342, %v372
  %v377 = vadd.f32 %v343, %v373
  %v378 = vadd.f32 %v344, %v374
  %v379 = vsel %vm357, %v362, %v375
  %v380 = vsel %vm357, %v363, %v376
  %v381 = vsel %vm357, %v364, %v377
  %v382 = vsel %vm357, %v365, %v378
  %383 = vst [vmem:[%s6] sm:$0xff] %v379
  %384 = vst [vmem:[%s6 + $0x8] sm:$0xff] %v380
  %385 = vst [vmem:[%s6 + $0x10] sm:$0xff] %v381
  %386 = vst [vmem:[%s6 + $0x18] sm:$0xff] %v382
  // Predicated region
  $region26: #{_lambda_.1} parent=0 // pred_check
    _
  $region27: #{_lambda_.1} parent=0 // pred_check_branch
    %388 = sbr.rel (0) target = $region29
  $region28: #{_lambda_.1} parent=0 // pred_region
    _
  $region29: #{_lambda_.1} parent=0 // pred_fallthru
    _
  // Predicated region
  $region30: #{_lambda_.1} parent=0 // pred_check
    _
  $region31: #{_lambda_.1} parent=0 // pred_check_branch
    %390 = sbr.rel (0) target = $region33
  $region32: #{_lambda_.1} parent=0 // pred_region
    _
  $region33: #{_lambda_.1} parent=0 // pred_fallthru
    _

</llo_original>
